<compile_context>
chip_gen: v7x
topology: tpu7x:2x2x1
jax: 0.10.0
libtpu: 0.0.40
codegen_flags: <defaults>
</compile_context>

<pallas_src>
import functools

import jax
import jax.numpy as jnp
from jax import lax
from jax.experimental import pallas as pl
from jax.experimental.pallas import tpu as pltpu

# ---- module defaults (ASPECTS_multiloss) -------------------------------------
ALPHA = 1.0
GAMMA = 2                 # integer exponent -> plain VPU multiplies
W_ASPECT = 1.0
W_CS = 0.0
W_DETECT = 0.0
ASPECT_THRESHOLD = 6.0    # dic_threshold of ASPECTS_loss
DETECT_THRESHOLD = 10.0   # hardcoded threshold in HemisphereDetectLoss


def _round_up(a, m):
    return ((a + m - 1) // m) * m


def _aspects_multiloss_kernel(wb_ref, x_ref, y_ref, out_ref, *,
                              n_rows, tb, ch, n_chunks, alpha, gamma,
                              w_cs, w_detect, aspect_thr, ragged, asp_cols):
    i = pl.program_id(0)
    w = wb_ref[0]                       # Conv1d(1, 1, k=1) weight
    b = wb_ref[1]                       # Conv1d(1, 1, k=1) bias

    # (8, 20) hemisphere selector; rows >= 2 are zero padding (MXU-friendly M).
    lane = lax.broadcasted_iota(jnp.int32, (8, 20), 1)
    row8 = lax.broadcasted_iota(jnp.int32, (8, 20), 0)
    sel_b = ((lane & 1) == row8).astype(jnp.bfloat16)
    nt_dims = (((1,), (1,)), ((), ()))  # contract both minor dims (q @ k.T form)

    def focal(logits, targets, a):
        # Stable BCE-with-logits + focal modulation; pt = exp(-bce) exactly as
        # in the PyTorch module (valid for soft labels too).
        e = jnp.exp(-jnp.abs(logits))
        bce = jnp.maximum(logits, 0.0) - logits * targets + jnp.log1p(e)
        pt = jnp.exp(-bce)
        om = 1.0 - pt
        if gamma == 2:
            mod = om * om
        elif gamma == 1:
            mod = om
        else:
            mod = om ** gamma
        if a == 1.0:
            a_t = targets
        else:
            a_t = targets * a + (1.0 - targets) * (1.0 - a)
        return a_t * mod * bce

    def region_sums(v):
        # Per-(hemisphere, sample) sums over the 10 regions via the idle MXU.
        # Two bf16 passes (hi + lo split) keep the result f32-exact.
        hi = v.astype(jnp.bfloat16)
        lo = (v - hi.astype(jnp.float32)).astype(jnp.bfloat16)
        s = lax.dot_general(sel_b, hi, nt_dims, preferred_element_type=jnp.float32)
        s = s + lax.dot_general(sel_b, lo, nt_dims, preferred_element_type=jnp.float32)
        return s[0:2, :]                # (2, ch) lane-dense

    def chunk(c, carry):
        main_acc, asp_acc, det_acc, cs_acc = carry
        r0 = c * ch
        x_c = x_ref[pl.ds(r0, ch), :]   # (ch, 20)
        y_c = y_ref[pl.ds(r0, ch), :]

        if ragged:
            # Zero padded rows before any transcendental; with alpha == 1 they
            # then contribute exactly 0 to every term.
            rr = lax.broadcasted_iota(jnp.int32, (ch, 1), 0)
            rvalid = (i * tb + r0 + rr) < n_rows            # (ch, 1) bool
            x_c = jnp.where(rvalid, x_c, 0.0)
            y_c = jnp.where(rvalid, y_c, 0.0)

        # --- 1) BinaryFocalLoss_2 over every (sample, region, hemisphere) ---
        f_main = focal(x_c, y_c, alpha)
        if ragged and alpha != 1.0:
            f_main = f_main * rvalid.astype(jnp.float32)
        main_acc = main_acc + jnp.sum(f_main, axis=0, keepdims=True)   # (1, 20)

        # --- 2) ASPECTS_loss, lane-dense (2, ch) slabs ---
        hs_x = region_sums(x_c)                                        # (2, ch)
        hs_y = region_sums(y_c)
        x_hs = hs_x * (0.1 * w) + b           # Conv1d(1,1,1) on the region mean
        y_th = (hs_y >= aspect_thr).astype(jnp.float32)
        f_asp = focal(x_hs, y_th, alpha)
        if ragged and alpha != 1.0:
            cc = lax.broadcasted_iota(jnp.int32, (1, ch), 1)
            cvalid = ((i * tb + r0 + cc) < n_rows).astype(jnp.float32)
            f_asp = f_asp * cvalid
        asp_acc = asp_acc + f_asp                                      # (2, ch)

        # --- 3) / 4) zero-weighted by default: trace-time gated ---
        if w_detect != 0.0 or w_cs != 0.0:
            # TODO(synk): gated-off path (w_detect = w_cs = 0 defaults); kept in
            # the simpler sparse (ch, 2) layout rather than densified.
            xr = x_c.reshape(x_c.shape[0], 10, 2)
            x_min = jnp.min(xr, axis=1)                                # (ch, 2)
        if w_detect != 0.0:
            jj = lax.broadcasted_iota(jnp.int32, (20, 2), 0)
            hh = lax.broadcasted_iota(jnp.int32, (20, 2), 1)
            sel_t = ((jj & 1) == hh).astype(jnp.float32)
            y_sum_sp = jnp.dot(y_c, sel_t, preferred_element_type=jnp.float32)
            y_th_d = (y_sum_sp >= DETECT_THRESHOLD).astype(jnp.float32)
            f_det = focal(x_min, y_th_d, 1.0)        # detect loss uses alpha=1
            det_acc = det_acc + jnp.sum(f_det, axis=0, keepdims=True)  # (1, 2)
        if w_cs != 0.0:
            l_roi = jnp.maximum(-x_c, 0.0)                             # (ch, 20)
            l_hs = jnp.maximum(x_min, 0.0)                             # (ch, 2)
            par = lax.broadcasted_iota(jnp.int32, (1, 20), 1) & 1
            l_hs_b = jnp.where(par == 0, l_hs[:, 0:1], l_hs[:, 1:2])   # (ch, 20)
            cs_acc = cs_acc + jnp.sum(l_roi * l_hs_b, axis=0, keepdims=True)

        return (main_acc, asp_acc, det_acc, cs_acc)

    init = (jnp.zeros((1, 20), jnp.float32),
            jnp.zeros((2, ch), jnp.float32),
            jnp.zeros((1, 2), jnp.float32),
            jnp.zeros((1, 20), jnp.float32))
    main_acc, asp_acc, det_acc, cs_acc = lax.fori_loop(0, n_chunks, chunk, init)

    # Lane-resident per-block partial sums; final (tiny) combine happens in JAX.
    out_ref[0, 0:1, 0:20] = main_acc
    if asp_cols == 128:
        a = asp_acc[:, 0:128]
        for k in range(1, ch // 128):
            a = a + asp_acc[:, k * 128:(k + 1) * 128]
        out_ref[0, 1:3, :] = a
    else:
        out_ref[0, 1:3, 0:1] = jnp.sum(asp_acc, axis=1, keepdims=True)
    if w_detect != 0.0:
        out_ref[0, 3:4, 0:2] = det_acc
    if w_cs != 0.0:
        out_ref[0, 4:5, 0:20] = cs_acc


def aspects_multiloss(x, y, conv_w, conv_b, *,
                      alpha=ALPHA, gamma=GAMMA, w_aspect=W_ASPECT, w_cs=W_CS,
                      w_detect=W_DETECT, aspect_threshold=ASPECT_THRESHOLD,
                      block_rows=8192, chunk_rows=1024):
    """x, y: anything reshapeable to (-1, 20); conv_w / conv_b: scalars."""
    x2 = jnp.asarray(x, jnp.float32).reshape(-1, 20)     # natural layout, no copy
    y2 = jnp.asarray(y, jnp.float32).reshape(-1, 20)
    n_rows = x2.shape[0]                                  # one row per sample

    chunk_rows = max(8, int(chunk_rows))
    block_rows = _round_up(min(max(int(block_rows), chunk_rows), 16384), chunk_rows)

    if n_rows <= chunk_rows:
        tb = n_rows                                       # single block == full array
        ch = n_rows
    else:
        # >= 2 blocks so the "parallel" grid axis can shard over v7x's 2 TCs.
        tb = min(block_rows, _round_up(pl.cdiv(n_rows, 2), chunk_rows))
        ch = chunk_rows
    n_chunks = tb // ch
    num_blocks = pl.cdiv(n_rows, tb)
    ragged = (n_rows % tb) != 0
    asp_cols = 128 if (ch % 128 == 0) else 1

    wb = jnp.stack([jnp.asarray(conv_w, jnp.float32).reshape(()),
                    jnp.asarray(conv_b, jnp.float32).reshape(())])   # SMEM scalars

    kernel = functools.partial(
        _aspects_multiloss_kernel,
        n_rows=n_rows, tb=tb, ch=ch, n_chunks=n_chunks, alpha=float(alpha),
        gamma=int(gamma), w_cs=float(w_cs), w_detect=float(w_detect),
        aspect_thr=float(aspect_threshold), ragged=ragged, asp_cols=asp_cols)

    # VMEM budget: 2 inputs x 2 pipeline buffers x (tb rows, lane-padded to 128)
    # f32 plus chunk-sized temporaries; keep the cap below v7x's 64 MiB physical
    # VMEM while raising v5e's 16 MiB default so the big tiles still compile.
    vmem_bytes = 4 * tb * 128 * 4 + 48 * ch * 128 * 4 + (4 << 20)
    vmem_limit = int(min(max(vmem_bytes, 32 << 20), 56 << 20))

    partials = pl.pallas_call(
        kernel,
        out_shape=jax.ShapeDtypeStruct((num_blocks, 8, 128), jnp.float32),
        grid=(num_blocks,),
        in_specs=[
            pl.BlockSpec(memory_space=pltpu.MemorySpace.SMEM),   # [conv_w, conv_b]
            pl.BlockSpec((tb, 20), lambda i: (i, 0)),            # x rows
            pl.BlockSpec((tb, 20), lambda i: (i, 0)),            # y rows
        ],
        out_specs=pl.BlockSpec((1, 8, 128), lambda i: (i, 0, 0)),
        compiler_params=pltpu.CompilerParams(
            dimension_semantics=("parallel",),
            vmem_limit_bytes=vmem_limit),
    )(wb, x2, y2)

    # Tiny final combine: per-block partial sums -> means -> weighted total.
    p = partials
    n_elem = jnp.float32(n_rows * 20)     # every (sample, region, hemisphere)
    n_hs = jnp.float32(n_rows * 2)        # per (sample, hemisphere) terms
    total = jnp.sum(p[:, 0, 0:20]) / n_elem
    total = total + w_aspect * (jnp.sum(p[:, 1:3, 0:asp_cols]) / n_hs)
    if w_detect != 0.0:
        total = total + w_detect * (jnp.sum(p[:, 3, 0:2]) / n_hs)
    if w_cs != 0.0:
        total = total + w_cs * (jnp.sum(p[:, 4, 0:20]) / n_elem)
    return total


# ---- pure-JAX reference (mirrors the PyTorch module exactly) ------------------
def _reference(x, y, conv_w, conv_b, *, alpha=ALPHA, gamma=GAMMA,
               w_aspect=W_ASPECT, w_cs=W_CS, w_detect=W_DETECT,
               aspect_threshold=ASPECT_THRESHOLD):
    x3 = jnp.asarray(x, jnp.float32).reshape(-1, 10, 2)
    y3 = jnp.asarray(y, jnp.float32).reshape(-1, 10, 2)

    def bce_logits(l, t):
        return jnp.maximum(l, 0.0) - l * t + jnp.log1p(jnp.exp(-jnp.abs(l)))

    def focal(l, t, a, g):
        bce = bce_logits(l, t)
        pt = jnp.exp(-bce)
        a_t = t * a + (1.0 - t) * (1.0 - a)
        return jnp.mean(a_t * (1.0 - pt) ** g * bce)

    focalloss = focal(x3, y3, alpha, gamma)

    y_sum = jnp.sum(y3, axis=1)
    y_th_a = (y_sum >= aspect_threshold).astype(jnp.float32)
    x_hs_a = jnp.mean(x3, axis=1) * conv_w + conv_b
    aspect_loss = focal(x_hs_a, y_th_a, alpha, gamma)

    y_th_d = (y_sum >= DETECT_THRESHOLD).astype(jnp.float32)
    x_min = jnp.min(x3, axis=1)
    detect_loss = focal(x_min, y_th_d, 1.0, gamma)

    cs_loss = jnp.mean(jnp.maximum(-x3, 0.0) * jnp.maximum(x_min, 0.0)[:, None, :])

    return focalloss + w_aspect * aspect_loss + w_cs * cs_loss + w_detect * detect_loss


if __name__ == "__main__":
    key = jax.random.PRNGKey(0)
    kx, ky, kw, kb = jax.random.split(key, 4)

    # Deterministic Conv1d(1, 1, kernel_size=1) parameters (weight, bias).
    conv_w = jax.random.normal(kw, (), dtype=jnp.float32)
    conv_b = jax.random.normal(kb, (), dtype=jnp.float32)

    # Small module-consistent case: batch=2, 20 logits per sample.
    B = 2
    x = jax.random.normal(kx, (B, 20), dtype=jnp.float32)
    y = jax.random.bernoulli(ky, 0.7, (B, 20)).astype(jnp.float32)
    loss = jax.block_until_ready(aspects_multiloss(x, y, conv_w, conv_b))
    ref = jax.block_until_ready(_reference(x, y, conv_w, conv_b))
    assert jnp.allclose(loss, ref, atol=1e-5, rtol=1e-5), (loss, ref)

    # Second case exercising the multi-block / ragged / chunked-loop paths.
    B2 = 2600
    x2 = jax.random.normal(kx, (B2, 20), dtype=jnp.float32)
    y2 = jax.random.bernoulli(ky, 0.6, (B2, 20)).astype(jnp.float32)
    loss2 = jax.block_until_ready(aspects_multiloss(x2, y2, conv_w, conv_b))
    ref2 = jax.block_until_ready(_reference(x2, y2, conv_w, conv_b))
    assert jnp.allclose(loss2, ref2, atol=1e-4, rtol=1e-4), (loss2, ref2)

    print("KERNEL_OK")
</pallas_src>

<mosaic_0001>
module attributes {stable_mosaic.version = 11 : i64} {
  func.func @_aspects_multiloss_kernel(%arg0: i32, %arg1: memref<2xf32, #tpu.memory_space<smem>>, %arg2: memref<2x20xf32, #tpu.memory_space<vmem>>, %arg3: memref<2x20xf32, #tpu.memory_space<vmem>>, %arg4: memref<1x8x128xf32, #tpu.memory_space<vmem>>) attributes {dimension_semantics = [#tpu.dimension_semantics<parallel>], iteration_bounds = array<i64: 1>, scalar_prefetch = 0 : i64, scratch_operands = 0 : i64, tpu.core_type = #tpu.core_type<tc>, window_params = [{transform_indices = @transform_0, window_bounds = array<i64: 2>}, {transform_indices = @transform_1, window_bounds = array<i64: 2, 20>}, {transform_indices = @transform_2, window_bounds = array<i64: 2, 20>}, {transform_indices = @transform_3, window_bounds = array<i64: 1, 8, 128>}]} {
    %c0 = arith.constant 0 : index
    %0 = memref.load %arg1[%c0] : memref<2xf32, #tpu.memory_space<smem>>
    %c1 = arith.constant 1 : index
    %1 = memref.load %arg1[%c1] : memref<2xf32, #tpu.memory_space<smem>>
    %2 = tpu.iota {dimensions = array<i32: 1>} : vector<8x20xi32>
    %3 = tpu.iota {dimensions = array<i32: 0>} : vector<8x20xi32>
    %c1_i32 = arith.constant 1 : i32
    %4 = vector.broadcast %c1_i32 : i32 to vector<8x20xi32>
    %5 = arith.andi %2, %4 : vector<8x20xi32>
    %6 = arith.cmpi eq, %5, %3 : vector<8x20xi32>
    %7 = arith.extui %6 : vector<8x20xi1> to vector<8x20xi32>
    %8 = arith.sitofp %7 : vector<8x20xi32> to vector<8x20xf32>
    %9 = arith.truncf %8 : vector<8x20xf32> to vector<8x20xbf16>
    %cst = arith.constant 0.000000e+00 : f32
    %10 = vector.broadcast %cst : f32 to vector<1x20xf32>
    %cst_0 = arith.constant 0.000000e+00 : f32
    %11 = vector.broadcast %cst_0 : f32 to vector<2x2xf32>
    %c0_i32 = arith.constant 0 : i32
    %c2_i32 = arith.constant 2 : i32
    %12 = arith.muli %c0_i32, %c2_i32 : i32
    %13 = arith.index_cast %12 : i32 to index
    %c0_1 = arith.constant 0 : index
    %14 = vector.load %arg2[%13, %c0_1] : memref<2x20xf32, #tpu.memory_space<vmem>>, vector<2x20xf32>
    %15 = arith.index_cast %12 : i32 to index
    %c0_2 = arith.constant 0 : index
    %16 = vector.load %arg3[%15, %c0_2] : memref<2x20xf32, #tpu.memory_space<vmem>>, vector<2x20xf32>
    %17 = math.absf %14 : vector<2x20xf32>
    %cst_3 = arith.constant 0.000000e+00 : f32
    %18 = vector.broadcast %cst_3 : f32 to vector<2x20xf32>
    %19 = arith.subf %18, %17 : vector<2x20xf32>
    %20 = math.exp %19 : vector<2x20xf32>
    %cst_4 = arith.constant 0.000000e+00 : f32
    %21 = vector.broadcast %cst_4 : f32 to vector<2x20xf32>
    %22 = arith.maximumf %14, %21 : vector<2x20xf32>
    %23 = arith.mulf %14, %16 : vector<2x20xf32>
    %24 = arith.subf %22, %23 : vector<2x20xf32>
    %25 = math.log1p %20 : vector<2x20xf32>
    %26 = arith.addf %24, %25 : vector<2x20xf32>
    %cst_5 = arith.constant 0.000000e+00 : f32
    %27 = vector.broadcast %cst_5 : f32 to vector<2x20xf32>
    %28 = arith.subf %27, %26 : vector<2x20xf32>
    %29 = math.exp %28 : vector<2x20xf32>
    %cst_6 = arith.constant 1.000000e+00 : f32
    %30 = vector.broadcast %cst_6 : f32 to vector<2x20xf32>
    %31 = arith.subf %30, %29 : vector<2x20xf32>
    %32 = arith.mulf %31, %31 : vector<2x20xf32>
    %33 = arith.mulf %16, %32 : vector<2x20xf32>
    %34 = arith.mulf %33, %26 : vector<2x20xf32>
    %cst_7 = arith.constant dense<0.000000e+00> : vector<20xf32>
    %35 = vector.multi_reduction <add>, %34, %cst_7 [0] : vector<2x20xf32> to vector<20xf32>
    %36 = vector.shape_cast %35 : vector<20xf32> to vector<1x20xf32>
    %37 = arith.addf %10, %36 : vector<1x20xf32>
    %38 = arith.truncf %14 : vector<2x20xf32> to vector<2x20xbf16>
    %39 = arith.extf %38 : vector<2x20xbf16> to vector<2x20xf32>
    %40 = arith.subf %14, %39 : vector<2x20xf32>
    %41 = arith.truncf %40 : vector<2x20xf32> to vector<2x20xbf16>
    %cst_8 = arith.constant dense<0.000000e+00> : vector<8x2xf32>
    %42 = tpu.matmul %9, %38, %cst_8 {dimension_numbers = #tpu.dot_dimension_numbers<[1], [1], [0], [0], [0, 0, 1, 0], [], []>} : vector<8x20xbf16>, vector<2x20xbf16>, vector<8x2xf32> -> vector<8x2xf32>
    %cst_9 = arith.constant dense<0.000000e+00> : vector<8x2xf32>
    %43 = tpu.matmul %9, %41, %cst_9 {dimension_numbers = #tpu.dot_dimension_numbers<[1], [1], [0], [0], [0, 0, 1, 0], [], []>} : vector<8x20xbf16>, vector<2x20xbf16>, vector<8x2xf32> -> vector<8x2xf32>
    %44 = arith.addf %42, %43 : vector<8x2xf32>
    %45 = vector.extract_strided_slice %44 {offsets = [0, 0], sizes = [2, 2], strides = [1, 1]} : vector<8x2xf32> to vector<2x2xf32>
    %46 = arith.truncf %16 : vector<2x20xf32> to vector<2x20xbf16>
    %47 = arith.extf %46 : vector<2x20xbf16> to vector<2x20xf32>
    %48 = arith.subf %16, %47 : vector<2x20xf32>
    %49 = arith.truncf %48 : vector<2x20xf32> to vector<2x20xbf16>
    %cst_10 = arith.constant dense<0.000000e+00> : vector<8x2xf32>
    %50 = tpu.matmul %9, %46, %cst_10 {dimension_numbers = #tpu.dot_dimension_numbers<[1], [1], [0], [0], [0, 0, 1, 0], [], []>} : vector<8x20xbf16>, vector<2x20xbf16>, vector<8x2xf32> -> vector<8x2xf32>
    %cst_11 = arith.constant dense<0.000000e+00> : vector<8x2xf32>
    %51 = tpu.matmul %9, %49, %cst_11 {dimension_numbers = #tpu.dot_dimension_numbers<[1], [1], [0], [0], [0, 0, 1, 0], [], []>} : vector<8x20xbf16>, vector<2x20xbf16>, vector<8x2xf32> -> vector<8x2xf32>
    %52 = arith.addf %50, %51 : vector<8x2xf32>
    %53 = vector.extract_strided_slice %52 {offsets = [0, 0], sizes = [2, 2], strides = [1, 1]} : vector<8x2xf32> to vector<2x2xf32>
    %cst_12 = arith.constant 1.000000e-01 : f32
    %54 = arith.mulf %cst_12, %0 : f32
    %55 = vector.broadcast %54 : f32 to vector<2x2xf32>
    %56 = arith.mulf %45, %55 : vector<2x2xf32>
    %57 = vector.broadcast %1 : f32 to vector<2x2xf32>
    %58 = arith.addf %56, %57 : vector<2x2xf32>
    %cst_13 = arith.constant 6.000000e+00 : f32
    %59 = vector.broadcast %cst_13 : f32 to vector<2x2xf32>
    %60 = arith.cmpf oge, %53, %59 : vector<2x2xf32>
    %61 = arith.extui %60 : vector<2x2xi1> to vector<2x2xi32>
    %62 = arith.sitofp %61 : vector<2x2xi32> to vector<2x2xf32>
    %63 = math.absf %58 : vector<2x2xf32>
    %cst_14 = arith.constant 0.000000e+00 : f32
    %64 = vector.broadcast %cst_14 : f32 to vector<2x2xf32>
    %65 = arith.subf %64, %63 : vector<2x2xf32>
    %66 = math.exp %65 : vector<2x2xf32>
    %cst_15 = arith.constant 0.000000e+00 : f32
    %67 = vector.broadcast %cst_15 : f32 to vector<2x2xf32>
    %68 = arith.maximumf %58, %67 : vector<2x2xf32>
    %69 = arith.mulf %58, %62 : vector<2x2xf32>
    %70 = arith.subf %68, %69 : vector<2x2xf32>
    %71 = math.log1p %66 : vector<2x2xf32>
    %72 = arith.addf %70, %71 : vector<2x2xf32>
    %cst_16 = arith.constant 0.000000e+00 : f32
    %73 = vector.broadcast %cst_16 : f32 to vector<2x2xf32>
    %74 = arith.subf %73, %72 : vector<2x2xf32>
    %75 = math.exp %74 : vector<2x2xf32>
    %cst_17 = arith.constant 1.000000e+00 : f32
    %76 = vector.broadcast %cst_17 : f32 to vector<2x2xf32>
    %77 = arith.subf %76, %75 : vector<2x2xf32>
    %78 = arith.mulf %77, %77 : vector<2x2xf32>
    %79 = arith.mulf %62, %78 : vector<2x2xf32>
    %80 = arith.mulf %79, %72 : vector<2x2xf32>
    %81 = arith.addf %11, %80 : vector<2x2xf32>
    %c1_i32_18 = arith.constant 1 : i32
    %c0_19 = arith.constant 0 : index
    %c0_20 = arith.constant 0 : index
    %c0_21 = arith.constant 0 : index
    %82 = vector.load %arg4[%c0_19, %c0_20, %c0_21] : memref<1x8x128xf32, #tpu.memory_space<vmem>>, vector<1x1x20xf32>
    %83 = vector.shape_cast %82 : vector<1x1x20xf32> to vector<1x20xf32>
    %84 = vector.shape_cast %37 : vector<1x20xf32> to vector<1x1x20xf32>
    tpu.vector_store %arg4[%c0_19, %c0_20, %c0_21], %84 {strides = array<i32>} : memref<1x8x128xf32, #tpu.memory_space<vmem>>, vector<1x1x20xf32>,
    %cst_22 = arith.constant dense<0.000000e+00> : vector<2xf32>
    %85 = vector.multi_reduction <add>, %81, %cst_22 [1] : vector<2x2xf32> to vector<2xf32>
    %86 = vector.shape_cast %85 : vector<2xf32> to vector<2x1xf32>
    %c0_23 = arith.constant 0 : index
    %c1_24 = arith.constant 1 : index
    %c0_25 = arith.constant 0 : index
    %87 = vector.load %arg4[%c0_23, %c1_24, %c0_25] : memref<1x8x128xf32, #tpu.memory_space<vmem>>, vector<1x2x1xf32>
    %88 = vector.shape_cast %87 : vector<1x2x1xf32> to vector<2x1xf32>
    %89 = vector.shape_cast %86 : vector<2x1xf32> to vector<1x2x1xf32>
    tpu.vector_store %arg4[%c0_23, %c1_24, %c0_25], %89 {strides = array<i32>} : memref<1x8x128xf32, #tpu.memory_space<vmem>>, vector<1x2x1xf32>,
    return
  }
  func.func @transform_0(%arg0: i32) -> i32 {
    %c0_i32 = arith.constant 0 : i32
    %c0_i32_0 = arith.constant 0 : i32
    return %c0_i32 : i32
  }
  func.func @transform_1(%arg0: i32) -> (i32, i32) {
    %c0_i32 = arith.constant 0 : i32
    %c0_i32_0 = arith.constant 0 : i32
    return %arg0, %c0_i32 : i32, i32
  }
  func.func @transform_2(%arg0: i32) -> (i32, i32) {
    %c0_i32 = arith.constant 0 : i32
    %c0_i32_0 = arith.constant 0 : i32
    return %arg0, %c0_i32 : i32, i32
  }
  func.func @transform_3(%arg0: i32) -> (i32, i32, i32) {
    %c0_i32 = arith.constant 0 : i32
    %c0_i32_0 = arith.constant 0 : i32
    %c0_i32_1 = arith.constant 0 : i32
    return %arg0, %c0_i32, %c0_i32_0 : i32, i32, i32
  }
}

</mosaic_0001>

<llo_original>
// kernel: tpu_custom_call.1
$region0: #{tpu_custom_call.1}
  #allocation0 [shape = 'u32[]', space=smem, size = 0x4, offset = 0x4, fixed_abs, tag = 'smem constant byte address 0x4 - core index']
  #allocation1 [shape = 'u32[144,128]{1,0:T(1,128)}', space=vmem, size = 0x12000, scoped, tag = 'internal scratch']
  %s0 = inlined_call_operand.hbm [shape: f32[2], index: 0, kind: input, shape index: {}]
  %s1 = inlined_call_operand.vmem [shape: f32[2,20], index: 1, kind: input, shape index: {}]
  %s2 = inlined_call_operand.vmem [shape: f32[2,20], index: 2, kind: input, shape index: {}]
  %s3 = inlined_call_operand.hbm [shape: f32[1,8,128], index: 3, kind: output, shape index: {}]
  %s4 = sld [smem:[#allocation0]]
  $region26: #{tpu_custom_call.1} parent=0
    _
  %s6 = ssub.s32 1, %s4
  %s7 = scalar_select 0, %s6, %s4
  $region1: #{tpu_custom_call.1} parent=0
    #allocation2 [shape = 'u8[512]{0}', space=smem, size = 0x200, scoped, tag = 'input window, operand 0, single buffered']
    #allocation3 [shape = 's32[1]{0}', space=sflag, size = 0x4, scoped, tag = 'scoped memory for tpu_custom_call.1']
    #allocation4 [shape = 's32[1]{0}', space=sflag, size = 0x4, scoped, tag = 'scoped memory for tpu_custom_call.1']
    #allocation5 [shape = 'u8[4096]{0}', space=vmem, size = 0x1000, scoped, tag = 'output window, operand 0, single buffered']
    %8 = vsyncpa [#allocation4], 0
    %9 = vsyncpa [#allocation3], 0
    // Predicated region
    $region2: #{tpu_custom_call.1} parent=1 // pred_check
      _
    $region3: #{tpu_custom_call.1} parent=1 // pred_check_branch
      %11 = sbr.rel (0) target = $region5
    $region4: #{tpu_custom_call.1} parent=1 // pred_region
      %s13 = ssub.s32 16, 16
      %14 = vsyncadd [#allocation4], %s13
      %17 = dma.hbm_to_smem %s0, 16, [#allocation2], [#allocation4]
    $region5: #{tpu_custom_call.1} parent=1 // pred_fallthru
      _
    // Predicated region
    $region6: #{tpu_custom_call.1} parent=1 // pred_check
      _
    $region7: #{tpu_custom_call.1} parent=1 // pred_check_branch
      %19 = sbr.rel (0) target = $region9
    $region8: #{tpu_custom_call.1} parent=1 // pred_region
      _
    $region9: #{tpu_custom_call.1} parent=1 // pred_fallthru
      _
    // Predicated region
    $region10: #{tpu_custom_call.1} parent=1 // pred_check
      _
    $region11: #{tpu_custom_call.1} parent=1 // pred_check_branch
      %21 = sbr.rel (0) target = $region13
    $region12: #{tpu_custom_call.1} parent=1 // pred_region
      _
    $region13: #{tpu_custom_call.1} parent=1 // pred_fallthru
      _
    // Predicated region
    $region14: #{tpu_custom_call.1} parent=1 // pred_check
      _
    $region15: #{tpu_custom_call.1} parent=1 // pred_check_branch
      %23 = sbr.rel (0) target = $region17
    $region16: #{tpu_custom_call.1} parent=1 // pred_region
      %24 = dma.done [#allocation4], 16
    $region17: #{tpu_custom_call.1} parent=1 // pred_fallthru
      _
    %25 = sfence
    %s27 = sld [smem:[#allocation2]]
    %s28 = sld [smem:[#allocation2 + $0x1]]
    %v29 = vlaneseq
    %v30 = vand.u32 %v29, 127
    %v31 = vlaneseq
    %v32 = vshrl.u32 %v31, 7
    %v33 = vand.u32 %v30, 1
    %vm34 = vcmp.eq.s32.totalorder %v33, %v32
    %v35 = vsel %vm34, 1, 0
    %v36 = vcvt.s32.f32 %v35
    %v37 = vpack.c.bf16 %v36, %v36
    %v38 = vld [vmem:[%s1] sm:$0x3]
    %v39 = vld [vmem:[%s2] sm:$0x3]
    %v40 = vand.u32 2147483647, %v38
    %v41 = vsub.f32 0.0, %v40
    %v42 = vmul.f32 %v41, 1.442695
    %v43 = vpow.pop %v42
    %v44 = vmax.f32 %v38, 0.0
    %v45 = vmul.f32 %v38, %v39
    %v46 = vsub.f32 %v44, %v45
    %v47 = vadd.f32 %v43, 1.0
    %v48 = vlog2.pop %v47
    %v49 = vmul.f32 %v48, 0.6931472
    %v50 = vmul.f32 -0.5, %v43
    %v51 = vadd.f32 %v50, 1.0
    %v52 = vmul.f32 %v51, %v43
    %v53 = vand.u32 2147483647, %v43
    %vm54 = vcmp.lt.f32.partialorder %v53, 0.0004427343
    %v55 = vsel %vm54, %v52, %v49
    %v56 = vadd.f32 %v46, %v55
    %v57 = vsub.f32 0.0, %v56
    %v58 = vmul.f32 %v57, 1.442695
    %v59 = vpow.pop %v58
    %v60 = vsub.f32 1.0, %v59
    %v61 = vmul.f32 %v60, %v60
    %v62 = vmul.f32 %v39, %v61
    %v63 = vmul.f32 %v62, %v56
    %vm64 = vcmask 156672
    %v65 = vsel %vm64, %v63, 0.0
    %v66 = vrot.slane %v65, 4
    %v67 = vadd.f32 %v65, %v66
    %v68 = vrot.slane %v67, 2
    %v69 = vadd.f32 %v67, %v68
    %v70 = vrot.slane %v69, 1
    %v71 = vadd.f32 %v69, %v70
    %v72 = vadd.f32 %v71, 0.0
    %v73 = vpack.c.bf16 %v38, %v38
    %v74 = vunpack.c.l.bf16 %v73
    %v75 = vsub.f32 %v38, %v74
    %v76 = vpack.c.bf16 %v75, %v75
    %vm77 = vcmask 162816
    %v79 = vsel %vm77, %v37, 0
    %v82 = vsel %vm77, %v76, 0
    %84 = vmatprep.subr.bf16.mxu0 0
    %85 = vmatpush1.bf16.xpose.msra.mxu0 %v82
    %86 = vmatprep.subr.bf16.mxu0 0
    %87 = vmatpush1.bf16.xpose.msra.mxu0 0
    %88 = vmatprep.subr.bf16.mxu0 0
    %89 = vmatpush1.bf16.xpose.msra.mxu0 0
    %90 = vmatprep.subr.bf16.mxu0 0
    %91 = vmatpush1.bf16.xpose.msra.mxu0 0
    %92 = vmatprep.subr.bf16.mxu0 0
    %93 = vmatpush1.bf16.xpose.msra.mxu0 0
    %94 = vmatprep.subr.bf16.mxu0 0
    %95 = vmatpush1.bf16.xpose.msra.mxu0 0
    %96 = vmatprep.subr.bf16.mxu0 0
    %97 = vmatpush1.bf16.xpose.msra.mxu0 0
    %98 = vmatprep.subr.bf16.mxu0 0
    %99 = vmatpush1.bf16.xpose.msra.mxu0 0
    %100 = vmatprep.subr.bf16.mxu0 0
    %101 = vmatpush1.bf16.xpose.msra.mxu0 0
    %102 = vmatprep.subr.bf16.mxu0 0
    %103 = vmatpush1.bf16.xpose.msra.mxu0 0
    %104 = vmatprep.subr.bf16.mxu0 0
    %105 = vmatpush1.bf16.xpose.msra.mxu0 0
    %106 = vmatprep.subr.bf16.mxu0 0
    %107 = vmatpush1.bf16.xpose.msra.mxu0 0
    %108 = vmatprep.subr.bf16.mxu0 0
    %109 = vmatpush1.bf16.xpose.msra.mxu0 0
    %110 = vmatprep.subr.bf16.mxu0 0
    %111 = vmatpush1.bf16.xpose.msra.mxu0 0
    %112 = vmatprep.subr.bf16.mxu0 0
    %113 = vmatpush1.bf16.xpose.msra.mxu0 0
    %114 = vmatprep.subr.bf16.mxu0 0
    %115 = vmatpush1.bf16.xpose.msra.mxu0 0
    %116 = vmatprep.mubr.bf16.mxu0 0
    %117 = vmatmul.mubr.bf16.gmra.mrb[0].mxu0 %v79
    %v118 = vpop.f32.mrb[0].mxu0
    %v119 = vadd.f32 0.0, %v118
    %v120 = vpop.f32.mrb[0].mxu0
    %v121 = vpop.f32.mrb[0].mxu0
    %v122 = vpop.f32.mrb[0].mxu0
    %123 = vdwg.mxu0
    %v125 = vsel %vm77, %v73, 0
    %127 = vmatprep.subr.bf16.mxu0 0
    %128 = vmatpush1.bf16.xpose.msra.mxu0 %v125
    %129 = vmatprep.subr.bf16.mxu0 0
    %130 = vmatpush1.bf16.xpose.msra.mxu0 0
    %131 = vmatprep.subr.bf16.mxu0 0
    %132 = vmatpush1.bf16.xpose.msra.mxu0 0
    %133 = vmatprep.subr.bf16.mxu0 0
    %134 = vmatpush1.bf16.xpose.msra.mxu0 0
    %135 = vmatprep.subr.bf16.mxu0 0
    %136 = vmatpush1.bf16.xpose.msra.mxu0 0
    %137 = vmatprep.subr.bf16.mxu0 0
    %138 = vmatpush1.bf16.xpose.msra.mxu0 0
    %139 = vmatprep.subr.bf16.mxu0 0
    %140 = vmatpush1.bf16.xpose.msra.mxu0 0
    %141 = vmatprep.subr.bf16.mxu0 0
    %142 = vmatpush1.bf16.xpose.msra.mxu0 0
    %143 = vmatprep.subr.bf16.mxu0 0
    %144 = vmatpush1.bf16.xpose.msra.mxu0 0
    %145 = vmatprep.subr.bf16.mxu0 0
    %146 = vmatpush1.bf16.xpose.msra.mxu0 0
    %147 = vmatprep.subr.bf16.mxu0 0
    %148 = vmatpush1.bf16.xpose.msra.mxu0 0
    %149 = vmatprep.subr.bf16.mxu0 0
    %150 = vmatpush1.bf16.xpose.msra.mxu0 0
    %151 = vmatprep.subr.bf16.mxu0 0
    %152 = vmatpush1.bf16.xpose.msra.mxu0 0
    %153 = vmatprep.subr.bf16.mxu0 0
    %154 = vmatpush1.bf16.xpose.msra.mxu0 0
    %155 = vmatprep.subr.bf16.mxu0 0
    %156 = vmatpush1.bf16.xpose.msra.mxu0 0
    %157 = vmatprep.subr.bf16.mxu0 0
    %158 = vmatpush1.bf16.xpose.msra.mxu0 0
    %159 = vmatprep.mubr.bf16.mxu0 0
    %160 = vmatmul.mubr.bf16.gmra.mrb[0].mxu0 %v79
    %v161 = vpop.f32.mrb[0].mxu0
    %v162 = vadd.f32 %v119, %v161
    %v163 = vpop.f32.mrb[0].mxu0
    %v164 = vpop.f32.mrb[0].mxu0
    %v165 = vpop.f32.mrb[0].mxu0
    %166 = vdwg.mxu0
    %v167 = vpack.c.bf16 %v39, %v39
    %v168 = vunpack.c.l.bf16 %v167
    %v169 = vsub.f32 %v39, %v168
    %v170 = vpack.c.bf16 %v169, %v169
    %v172 = vsel %vm77, %v170, 0
    %174 = vmatprep.subr.bf16.mxu0 0
    %175 = vmatpush1.bf16.xpose.msra.mxu0 %v172
    %176 = vmatprep.subr.bf16.mxu0 0
    %177 = vmatpush1.bf16.xpose.msra.mxu0 0
    %178 = vmatprep.subr.bf16.mxu0 0
    %179 = vmatpush1.bf16.xpose.msra.mxu0 0
    %180 = vmatprep.subr.bf16.mxu0 0
    %181 = vmatpush1.bf16.xpose.msra.mxu0 0
    %182 = vmatprep.subr.bf16.mxu0 0
    %183 = vmatpush1.bf16.xpose.msra.mxu0 0
    %184 = vmatprep.subr.bf16.mxu0 0
    %185 = vmatpush1.bf16.xpose.msra.mxu0 0
    %186 = vmatprep.subr.bf16.mxu0 0
    %187 = vmatpush1.bf16.xpose.msra.mxu0 0
    %188 = vmatprep.subr.bf16.mxu0 0
    %189 = vmatpush1.bf16.xpose.msra.mxu0 0
    %190 = vmatprep.subr.bf16.mxu0 0
    %191 = vmatpush1.bf16.xpose.msra.mxu0 0
    %192 = vmatprep.subr.bf16.mxu0 0
    %193 = vmatpush1.bf16.xpose.msra.mxu0 0
    %194 = vmatprep.subr.bf16.mxu0 0
    %195 = vmatpush1.bf16.xpose.msra.mxu0 0
    %196 = vmatprep.subr.bf16.mxu0 0
    %197 = vmatpush1.bf16.xpose.msra.mxu0 0
    %198 = vmatprep.subr.bf16.mxu0 0
    %199 = vmatpush1.bf16.xpose.msra.mxu0 0
    %200 = vmatprep.subr.bf16.mxu0 0
    %201 = vmatpush1.bf16.xpose.msra.mxu0 0
    %202 = vmatprep.subr.bf16.mxu0 0
    %203 = vmatpush1.bf16.xpose.msra.mxu0 0
    %204 = vmatprep.subr.bf16.mxu0 0
    %205 = vmatpush1.bf16.xpose.msra.mxu0 0
    %206 = vmatprep.mubr.bf16.mxu0 0
    %207 = vmatmul.mubr.bf16.gmra.mrb[0].mxu0 %v79
    %v208 = vpop.f32.mrb[0].mxu0
    %v209 = vadd.f32 0.0, %v208
    %v210 = vpop.f32.mrb[0].mxu0
    %v211 = vpop.f32.mrb[0].mxu0
    %v212 = vpop.f32.mrb[0].mxu0
    %213 = vdwg.mxu0
    %v215 = vsel %vm77, %v167, 0
    %217 = vmatprep.subr.bf16.mxu0 0
    %218 = vmatpush1.bf16.xpose.msra.mxu0 %v215
    %219 = vmatprep.subr.bf16.mxu0 0
    %220 = vmatpush1.bf16.xpose.msra.mxu0 0
    %221 = vmatprep.subr.bf16.mxu0 0
    %222 = vmatpush1.bf16.xpose.msra.mxu0 0
    %223 = vmatprep.subr.bf16.mxu0 0
    %224 = vmatpush1.bf16.xpose.msra.mxu0 0
    %225 = vmatprep.subr.bf16.mxu0 0
    %226 = vmatpush1.bf16.xpose.msra.mxu0 0
    %227 = vmatprep.subr.bf16.mxu0 0
    %228 = vmatpush1.bf16.xpose.msra.mxu0 0
    %229 = vmatprep.subr.bf16.mxu0 0
    %230 = vmatpush1.bf16.xpose.msra.mxu0 0
    %231 = vmatprep.subr.bf16.mxu0 0
    %232 = vmatpush1.bf16.xpose.msra.mxu0 0
    %233 = vmatprep.subr.bf16.mxu0 0
    %234 = vmatpush1.bf16.xpose.msra.mxu0 0
    %235 = vmatprep.subr.bf16.mxu0 0
    %236 = vmatpush1.bf16.xpose.msra.mxu0 0
    %237 = vmatprep.subr.bf16.mxu0 0
    %238 = vmatpush1.bf16.xpose.msra.mxu0 0
    %239 = vmatprep.subr.bf16.mxu0 0
    %240 = vmatpush1.bf16.xpose.msra.mxu0 0
    %241 = vmatprep.subr.bf16.mxu0 0
    %242 = vmatpush1.bf16.xpose.msra.mxu0 0
    %243 = vmatprep.subr.bf16.mxu0 0
    %244 = vmatpush1.bf16.xpose.msra.mxu0 0
    %245 = vmatprep.subr.bf16.mxu0 0
    %246 = vmatpush1.bf16.xpose.msra.mxu0 0
    %247 = vmatprep.subr.bf16.mxu0 0
    %248 = vmatpush1.bf16.xpose.msra.mxu0 0
    %249 = vmatprep.mubr.bf16.mxu0 0
    %250 = vmatmul.mubr.bf16.gmra.mrb[0].mxu0 %v79
    %v251 = vpop.f32.mrb[0].mxu0
    %v252 = vadd.f32 %v209, %v251
    %v253 = vpop.f32.mrb[0].mxu0
    %v254 = vpop.f32.mrb[0].mxu0
    %v255 = vpop.f32.mrb[0].mxu0
    %256 = vdwg.mxu0
    %s257 = smul.f32 %s27, 0.1
    %v258 = vstv %s257
    %v259 = vmul.f32 %v162, %v258
    %v260 = vstv %s28
    %v261 = vadd.f32 %v259, %v260
    %vm262 = vcmp.ge.f32.partialorder %v252, 6.0
    %v263 = vsel %vm262, 1, 0
    %v264 = vcvt.s32.f32 %v263
    %v265 = vand.u32 2147483647, %v261
    %v266 = vsub.f32 0.0, %v265
    %v267 = vmul.f32 %v266, 1.442695
    %v268 = vpow.pop %v267
    %v269 = vmax.f32 %v261, 0.0
    %v270 = vmul.f32 %v261, %v264
    %v271 = vsub.f32 %v269, %v270
    %v272 = vadd.f32 %v268, 1.0
    %v273 = vlog2.pop %v272
    %v274 = vmul.f32 %v273, 0.6931472
    %v275 = vmul.f32 -0.5, %v268
    %v276 = vadd.f32 %v275, 1.0
    %v277 = vmul.f32 %v276, %v268
    %v278 = vand.u32 2147483647, %v268
    %vm279 = vcmp.lt.f32.partialorder %v278, 0.0004427343
    %v280 = vsel %vm279, %v277, %v274
    %v281 = vadd.f32 %v271, %v280
    %v282 = vsub.f32 0.0, %v281
    %v283 = vmul.f32 %v282, 1.442695
    %v284 = vpow.pop %v283
    %v285 = vsub.f32 1.0, %v284
    %v286 = vmul.f32 %v285, %v285
    %v287 = vmul.f32 %v264, %v286
    %v288 = vmul.f32 %v287, %v281
    %v289 = vadd.f32 %v288, 0.0
    %vm290 = vcmask 155648
    %291 = vst.msk [vmem:[#allocation5] sm:$0x1] %vm290, %v72
    %vm292 = vcmask 9216
    %v293 = vsel %vm292, %v289, 0.0
    %294 = vadd.xlane.f32.xlu0 %v293
    %v295 = vpop.xlane.xlu0 %294
    %vm296 = vcmask 1024
    %297 = vst.msk [vmem:[#allocation5 + $0x1] sm:$0x3] %vm296, %v295
    // Predicated region
    $region18: #{tpu_custom_call.1} parent=1 // pred_check
      _
    $region19: #{tpu_custom_call.1} parent=1 // pred_check_branch
      %299 = sbr.rel (0) target = $region21
    $region20: #{tpu_custom_call.1} parent=1 // pred_region
      %s301 = ssub.s32 128, 128
      %302 = vsyncadd [#allocation3], %s301
      %s304 = sshll.u32 [#allocation5], 4
      %s305 = int_to_ptr.vmem [resolvable:$true] %s304
      %307 = dma.vmem_to_hbm [thread:$0]  %s305, 128, %s3, [#allocation3]
    $region21: #{tpu_custom_call.1} parent=1 // pred_fallthru
      _
    // Predicated region
    $region22: #{tpu_custom_call.1} parent=1 // pred_check
      _
    $region23: #{tpu_custom_call.1} parent=1 // pred_check_branch
      %309 = sbr.rel (0) target = $region25
    $region24: #{tpu_custom_call.1} parent=1 // pred_region
      %310 = dma.done [#allocation3], 128
    $region25: #{tpu_custom_call.1} parent=1 // pred_fallthru
      _
    %311 = vsyncpa [#allocation3], 1
    %312 = vsyncpa [#allocation4], 1

</llo_original>
